<compile_context>
chip_gen: v7x
topology: tpu7x:2x2x1
jax: 0.10.0
libtpu: 0.0.40
codegen_flags: <defaults>
</compile_context>

<pallas_src>
import functools

import jax
import jax.numpy as jnp
from jax.experimental import pallas as pl
from jax.experimental.pallas import tpu as pltpu


def _sublane(dtype):
    itemsize = jnp.dtype(dtype).itemsize
    if itemsize >= 4:
        return 8
    if itemsize == 2:
        return 16
    return 32


def _device_info():
    """Return (device_kind_lowercase, per-core VMEM bytes) with safe fallbacks."""
    kind = ""
    try:
        kind = jax.devices()[0].device_kind.lower()
    except Exception:
        pass
    vmem = None
    try:
        vmem = int(pltpu.get_tpu_info().vmem_capacity_bytes)
    except Exception:
        vmem = None
    if not vmem:
        vmem = (64 if "v7" in kind else 128) * 1024 * 1024
    return kind, vmem


def _attention_kernel(x_ref, wt_ref, b_ref, q_ref, o_ref, *,
                      s_real, s_pad, cs, mul_dtype):
    # x_ref : (TB, Sp, D) candidate vectors for this batch tile (input dtype)
    # wt_ref: (D, Q)      linear weight, pre-transposed (W^T), input dtype
    # b_ref : (1, Q)      linear bias (f32)
    # q_ref : (1, Q)      attention query vector (f32)
    # o_ref : (TB, D)     pooled output
    TB = x_ref.shape[0]
    D = x_ref.shape[2]
    Q = wt_ref.shape[1]

    # ---- scores: temp = tanh(x @ W^T + b); scores = temp . q ----------------
    # Batch dim folded into the matmul rows (free collapse: Sp sublane-aligned).
    x2 = x_ref[...].reshape(TB * s_pad, D)
    temp = jnp.tanh(
        jnp.dot(x2, wt_ref[...], preferred_element_type=jnp.float32)
        + b_ref[...]
    )                                                       # (TB*Sp, Q) f32
    # Lane reduction over Q (no second MXU pass, no transposes).
    scores = jnp.sum(temp.reshape(TB, s_pad, Q) * q_ref[...], axis=-1)  # (TB, Sp)

    if s_pad != s_real:
        col = jax.lax.broadcasted_iota(jnp.int32, (TB, s_pad), 1)
        scores = jnp.where(col < s_real, scores, -jnp.inf)

    # ---- softmax over the candidate axis (last axis -> lanes), exact norm ---
    m = jnp.max(scores, axis=-1, keepdims=True)
    e = jnp.exp(scores - m)
    w = e / jnp.sum(e, axis=-1, keepdims=True)              # (TB, Sp) f32

    # ---- weighted sum: chunked over S, multiply in mul_dtype, f32 accumulate.
    # No full f32 copy of x and no (TB,Sp,D)-sized product is ever live.
    w_mul = w.astype(mul_dtype)
    acc = jnp.zeros((TB, D), jnp.float32)
    for lo in range(0, s_pad, cs):
        hi = min(lo + cs, s_pad)
        xc = x_ref[:, lo:hi, :]                             # (TB, c, D) input dtype
        wc = w_mul[:, lo:hi]                                # (TB, c)
        prod = wc[:, :, None] * xc.astype(mul_dtype)        # (TB, c, D) mul_dtype
        acc = acc + jnp.sum(prod.astype(jnp.float32), axis=1)
    o_ref[...] = acc.astype(o_ref.dtype)


def attention_network_pallas(candidate_vector, weight, bias, query_vector, *, tb=None):
    """candidate_vector: (B, S, D); weight: (Q, D); bias: (Q,); query_vector: (Q,)."""
    B, S, D = candidate_vector.shape
    Q = weight.shape[0]
    dtype = candidate_vector.dtype
    itemsize = jnp.dtype(dtype).itemsize
    sub = _sublane(dtype)

    kind, vmem_phys = _device_info()
    # Generation-aware scoped-VMEM budget: ~96 MiB on 128 MiB parts (v5e/v6e),
    # ~48 MiB on 64 MiB parts (v7x).
    vmem_limit = int(min((vmem_phys * 3) // 4, 100 * 1024 * 1024))

    # v5e has no bf16 VALU: multiply the weighted sum in f32 there; otherwise
    # multiply in the input dtype and accumulate in f32.
    if itemsize >= 4 or "v5" in kind:
        mul_dtype = jnp.float32
    else:
        mul_dtype = dtype
    mul_isize = jnp.dtype(mul_dtype).itemsize

    # Pad S to a sublane multiple so the (TB,S,D)<->(TB*S,D) reshapes are free;
    # padded positions are masked to -inf before the softmax.
    Sp = sub * pl.cdiv(S, sub)
    if Sp != S:
        candidate_vector = jnp.pad(candidate_vector, ((0, 0), (0, Sp - S), (0, 0)))

    # S-chunk for the weighted-sum accumulation: sublane multiple, at most ~32
    # unrolled chunks.
    cs = sub * max(1, pl.cdiv(Sp, sub * 32))

    if tb is None:
        # Per-batch-row VMEM footprint (block + in-kernel intermediates).
        per_row = (
            2 * Sp * D * itemsize          # input block (double-buffered)
            + Sp * Q * 4                   # temp (f32)
            + 4 * Sp * 4                   # scores / exp / weights (f32)
            + cs * D * (mul_isize + 4)     # per-chunk product + f32 partial
            + 2 * D * itemsize             # output block (double-buffered)
            + D * 4                        # f32 accumulator
        )
        param_bytes = D * Q * itemsize + 2 * Q * 4
        budget = max(per_row, (vmem_limit * 6) // 10 - param_bytes)
        cap = max(sub, ((budget // per_row) // sub) * sub)
        cap = min(cap, 2048)
        tb = min(cap, sub * pl.cdiv(B, sub))
        # v7x: keep at least 2 grid steps so the "parallel" batch axis can be
        # sharded across both TensorCores.
        if "v7" in kind and sub * pl.cdiv(B, sub) > sub:
            half = sub * pl.cdiv(pl.cdiv(B, 2), sub)
            tb = max(sub, min(tb, half))
    tb = max(sub, (tb // sub) * sub)

    # Pad batch so every grid step gets a full (tb, Sp, D) tile; padded rows
    # are zeros (finite scores, softmax well-defined) and sliced off afterwards.
    Bp = tb * pl.cdiv(B, tb)
    if Bp != B:
        candidate_vector = jnp.pad(candidate_vector, ((0, Bp - B), (0, 0), (0, 0)))

    w_t = weight.T.astype(dtype)                       # (D, Q), MXU-native dtype
    b2 = bias.reshape(1, Q).astype(jnp.float32)        # f32 VPU math (v5e-safe)
    q2 = query_vector.reshape(1, Q).astype(jnp.float32)

    kernel = functools.partial(
        _attention_kernel, s_real=S, s_pad=Sp, cs=cs, mul_dtype=mul_dtype)

    def _in_specs(single_buffer_params):
        pm = dict(pipeline_mode=pl.Buffered(1)) if single_buffer_params else {}
        return [
            pl.BlockSpec((tb, Sp, D), lambda b: (b, 0, 0)),   # batch tile
            pl.BlockSpec((D, Q), lambda b: (0, 0), **pm),     # W^T (shared, fetched once)
            pl.BlockSpec((1, Q), lambda b: (0, 0), **pm),     # bias (shared)
            pl.BlockSpec((1, Q), lambda b: (0, 0), **pm),     # query (shared)
        ]

    def _run(single_buffer_params):
        return pl.pallas_call(
            kernel,
            out_shape=jax.ShapeDtypeStruct((Bp, D), dtype),
            grid_spec=pltpu.PrefetchScalarGridSpec(
                num_scalar_prefetch=0,
                grid=(Bp // tb,),
                in_specs=_in_specs(single_buffer_params),
                out_specs=pl.BlockSpec((tb, D), lambda b: (b, 0)),
            ),
            compiler_params=pltpu.CompilerParams(
                dimension_semantics=("parallel",),
                vmem_limit_bytes=vmem_limit,
            ),
        )(candidate_vector, w_t, b2, q2)

    try:
        out = _run(True)     # single-buffered shared parameter blocks
    except Exception:
        out = _run(False)    # conservative fallback: default double-buffering
    return out[:B]


def attention_network_ref(candidate_vector, weight, bias, query_vector):
    temp = jnp.tanh(jnp.einsum("bsd,qd->bsq", candidate_vector, weight) + bias)
    scores = jnp.einsum("bsq,q->bs", temp, query_vector)
    w = jax.nn.softmax(scores, axis=1)
    return jnp.einsum("bs,bsd->bd", w, candidate_vector)


if __name__ == "__main__":
    # Small shapes: batch=2, num candidates=8, candidate_dim=32, query_dim=16
    B, S, D_cand, Q_dim = 2, 8, 32, 16

    key = jax.random.PRNGKey(0)
    kx, kw, kb, kq = jax.random.split(key, 4)

    candidate_vector = jax.random.normal(kx, (B, S, D_cand), dtype=jnp.float32)

    # Deterministic parameter init (mimics nn.Linear uniform bounds and the
    # query vector's uniform(-0.1, 0.1)).
    lim = 1.0 / (D_cand ** 0.5)
    weight = jax.random.uniform(kw, (Q_dim, D_cand), jnp.float32, -lim, lim)
    bias = jax.random.uniform(kb, (Q_dim,), jnp.float32, -lim, lim)
    query_vector = jax.random.uniform(kq, (Q_dim,), jnp.float32, -0.1, 0.1)

    out = attention_network_pallas(candidate_vector, weight, bias, query_vector)
    out = jax.block_until_ready(out)

    ref = attention_network_ref(candidate_vector, weight, bias, query_vector)
    assert out.shape == (B, D_cand)
    assert jnp.allclose(out, ref, atol=2e-3, rtol=2e-3), "mismatch vs reference"

    print("KERNEL_OK")
</pallas_src>

<mosaic_0001>
module attributes {stable_mosaic.version = 11 : i64} {
  func.func @_attention_kernel(%arg0: i32, %arg1: memref<8x8x32xf32, #tpu.memory_space<vmem>>, %arg2: memref<32x16xf32, #tpu.memory_space<vmem>>, %arg3: memref<1x16xf32, #tpu.memory_space<vmem>>, %arg4: memref<1x16xf32, #tpu.memory_space<vmem>>, %arg5: memref<8x32xf32, #tpu.memory_space<vmem>>) attributes {dimension_semantics = [#tpu.dimension_semantics<parallel>], iteration_bounds = array<i64: 1>, scalar_prefetch = 0 : i64, scratch_operands = 0 : i64, tpu.core_type = #tpu.core_type<tc>, window_params = [{transform_indices = @transform_0, window_bounds = array<i64: 8, 8, 32>}, {pipeline_mode = #tpu.pipeline_mode<synchronous>, transform_indices = @transform_1, window_bounds = array<i64: 32, 16>}, {pipeline_mode = #tpu.pipeline_mode<synchronous>, transform_indices = @transform_2, window_bounds = array<i64: 1, 16>}, {pipeline_mode = #tpu.pipeline_mode<synchronous>, transform_indices = @transform_3, window_bounds = array<i64: 1, 16>}, {transform_indices = @transform_4, window_bounds = array<i64: 8, 32>}]} {
    %c0 = arith.constant 0 : index
    %c0_0 = arith.constant 0 : index
    %c0_1 = arith.constant 0 : index
    %0 = vector.load %arg1[%c0, %c0_0, %c0_1] : memref<8x8x32xf32, #tpu.memory_space<vmem>>, vector<8x8x32xf32>
    %1 = vector.shape_cast %0 : vector<8x8x32xf32> to vector<64x32xf32>
    %c0_2 = arith.constant 0 : index
    %c0_3 = arith.constant 0 : index
    %2 = vector.load %arg2[%c0_2, %c0_3] : memref<32x16xf32, #tpu.memory_space<vmem>>, vector<32x16xf32>
    %cst = arith.constant dense<0.000000e+00> : vector<64x16xf32>
    %3 = tpu.matmul %1, %2, %cst {dimension_numbers = #tpu.dot_dimension_numbers<[1], [0], [0], [1], [0, 0, 1, 1], [], []>} : vector<64x32xf32>, vector<32x16xf32>, vector<64x16xf32> -> vector<64x16xf32>
    %c0_4 = arith.constant 0 : index
    %c0_5 = arith.constant 0 : index
    %4 = vector.load %arg3[%c0_4, %c0_5] : memref<1x16xf32, #tpu.memory_space<vmem>>, vector<1x16xf32>
    %5 = vector.broadcast %4 : vector<1x16xf32> to vector<64x16xf32>
    %6 = arith.addf %3, %5 : vector<64x16xf32>
    %7 = math.tanh %6 : vector<64x16xf32>
    %8 = vector.shape_cast %7 : vector<64x16xf32> to vector<8x8x16xf32>
    %c0_6 = arith.constant 0 : index
    %c0_7 = arith.constant 0 : index
    %9 = vector.load %arg4[%c0_6, %c0_7] : memref<1x16xf32, #tpu.memory_space<vmem>>, vector<1x16xf32>
    %10 = vector.shape_cast %9 : vector<1x16xf32> to vector<1x1x16xf32>
    %11 = vector.broadcast %10 : vector<1x1x16xf32> to vector<8x8x16xf32>
    %12 = arith.mulf %8, %11 : vector<8x8x16xf32>
    %cst_8 = arith.constant dense<0.000000e+00> : vector<8x8xf32>
    %13 = vector.multi_reduction <add>, %12, %cst_8 [2] : vector<8x8x16xf32> to vector<8x8xf32>
    %cst_9 = arith.constant dense<0xFF800000> : vector<8xf32>
    %14 = vector.multi_reduction <maximumf>, %13, %cst_9 [1] : vector<8x8xf32> to vector<8xf32>
    %15 = vector.shape_cast %14 : vector<8xf32> to vector<8x1xf32>
    %16 = vector.broadcast %15 : vector<8x1xf32> to vector<8x8xf32>
    %17 = arith.subf %13, %16 : vector<8x8xf32>
    %18 = math.exp %17 : vector<8x8xf32>
    %cst_10 = arith.constant dense<0.000000e+00> : vector<8xf32>
    %19 = vector.multi_reduction <add>, %18, %cst_10 [1] : vector<8x8xf32> to vector<8xf32>
    %20 = vector.shape_cast %19 : vector<8xf32> to vector<8x1xf32>
    %21 = vector.broadcast %20 : vector<8x1xf32> to vector<8x8xf32>
    %22 = arith.divf %18, %21 : vector<8x8xf32>
    %cst_11 = arith.constant 0.000000e+00 : f32
    %23 = vector.broadcast %cst_11 : f32 to vector<8x32xf32>
    %c0_12 = arith.constant 0 : index
    %c0_13 = arith.constant 0 : index
    %c0_14 = arith.constant 0 : index
    %24 = vector.load %arg1[%c0_12, %c0_13, %c0_14] : memref<8x8x32xf32, #tpu.memory_space<vmem>>, vector<8x8x32xf32>
    %25 = vector.shape_cast %22 : vector<8x8xf32> to vector<8x8x1xf32>
    %26 = vector.broadcast %25 : vector<8x8x1xf32> to vector<8x8x32xf32>
    %27 = arith.mulf %26, %24 : vector<8x8x32xf32>
    %cst_15 = arith.constant dense<0.000000e+00> : vector<8x32xf32>
    %28 = vector.multi_reduction <add>, %27, %cst_15 [1] : vector<8x8x32xf32> to vector<8x32xf32>
    %29 = arith.addf %23, %28 : vector<8x32xf32>
    %c0_16 = arith.constant 0 : index
    %c0_17 = arith.constant 0 : index
    %30 = vector.load %arg5[%c0_16, %c0_17] : memref<8x32xf32, #tpu.memory_space<vmem>>, vector<8x32xf32>
    tpu.vector_store %arg5[%c0_16, %c0_17], %29 {strides = array<i32>} : memref<8x32xf32, #tpu.memory_space<vmem>>, vector<8x32xf32>,
    return
  }
  func.func @transform_0(%arg0: i32) -> (i32, i32, i32) {
    %c0_i32 = arith.constant 0 : i32
    %c0_i32_0 = arith.constant 0 : i32
    %c0_i32_1 = arith.constant 0 : i32
    return %arg0, %c0_i32, %c0_i32_0 : i32, i32, i32
  }
  func.func @transform_1(%arg0: i32) -> (i32, i32) {
    %c0_i32 = arith.constant 0 : i32
    %c0_i32_0 = arith.constant 0 : i32
    %c0_i32_1 = arith.constant 0 : i32
    return %c0_i32, %c0_i32_0 : i32, i32
  }
  func.func @transform_2(%arg0: i32) -> (i32, i32) {
    %c0_i32 = arith.constant 0 : i32
    %c0_i32_0 = arith.constant 0 : i32
    %c0_i32_1 = arith.constant 0 : i32
    return %c0_i32, %c0_i32_0 : i32, i32
  }
  func.func @transform_3(%arg0: i32) -> (i32, i32) {
    %c0_i32 = arith.constant 0 : i32
    %c0_i32_0 = arith.constant 0 : i32
    %c0_i32_1 = arith.constant 0 : i32
    return %c0_i32, %c0_i32_0 : i32, i32
  }
  func.func @transform_4(%arg0: i32) -> (i32, i32) {
    %c0_i32 = arith.constant 0 : i32
    %c0_i32_0 = arith.constant 0 : i32
    return %arg0, %c0_i32 : i32, i32
  }
}

module attributes {stable_mosaic.version = 11 : i64} {
  func.func @_attention_kernel(%arg0: i32, %arg1: memref<8x8x32xf32, #tpu.memory_space<vmem>>, %arg2: memref<32x16xf32, #tpu.memory_space<vmem>>, %arg3: memref<1x16xf32, #tpu.memory_space<vmem>>, %arg4: memref<1x16xf32, #tpu.memory_space<vmem>>, %arg5: memref<8x32xf32, #tpu.memory_space<vmem>>) attributes {dimension_semantics = [#tpu.dimension_semantics<parallel>], iteration_bounds = array<i64: 1>, scalar_prefetch = 0 : i64, scratch_operands = 0 : i64, tpu.core_type = #tpu.core_type<tc>, window_params = [{transform_indices = @transform_0, window_bounds = array<i64: 8, 8, 32>}, {pipeline_mode = #tpu.pipeline_mode<synchronous>, transform_indices = @transform_1, window_bounds = array<i64: 32, 16>}, {pipeline_mode = #tpu.pipeline_mode<synchronous>, transform_indices = @transform_2, window_bounds = array<i64: 1, 16>}, {pipeline_mode = #tpu.pipeline_mode<synchronous>, transform_indices = @transform_3, window_bounds = array<i64: 1, 16>}, {transform_indices = @transform_4, window_bounds = array<i64: 8, 32>}]} {
    %c0 = arith.constant 0 : index
    %c0_0 = arith.constant 0 : index
    %c0_1 = arith.constant 0 : index
    %0 = vector.load %arg1[%c0, %c0_0, %c0_1] : memref<8x8x32xf32, #tpu.memory_space<vmem>>, vector<8x8x32xf32>
    %1 = vector.shape_cast %0 : vector<8x8x32xf32> to vector<64x32xf32>
    %c0_2 = arith.constant 0 : index
    %c0_3 = arith.constant 0 : index
    %2 = vector.load %arg2[%c0_2, %c0_3] : memref<32x16xf32, #tpu.memory_space<vmem>>, vector<32x16xf32>
    %cst = arith.constant dense<0.000000e+00> : vector<64x16xf32>
    %3 = tpu.matmul %1, %2, %cst {dimension_numbers = #tpu.dot_dimension_numbers<[1], [0], [0], [1], [0, 0, 1, 1], [], []>} : vector<64x32xf32>, vector<32x16xf32>, vector<64x16xf32> -> vector<64x16xf32>
    %c0_4 = arith.constant 0 : index
    %c0_5 = arith.constant 0 : index
    %4 = vector.load %arg3[%c0_4, %c0_5] : memref<1x16xf32, #tpu.memory_space<vmem>>, vector<1x16xf32>
    %5 = vector.broadcast %4 : vector<1x16xf32> to vector<64x16xf32>
    %6 = arith.addf %3, %5 : vector<64x16xf32>
    %7 = math.tanh %6 : vector<64x16xf32>
    %8 = vector.shape_cast %7 : vector<64x16xf32> to vector<8x8x16xf32>
    %c0_6 = arith.constant 0 : index
    %c0_7 = arith.constant 0 : index
    %9 = vector.load %arg4[%c0_6, %c0_7] : memref<1x16xf32, #tpu.memory_space<vmem>>, vector<1x16xf32>
    %10 = vector.shape_cast %9 : vector<1x16xf32> to vector<1x1x16xf32>
    %11 = vector.broadcast %10 : vector<1x1x16xf32> to vector<8x8x16xf32>
    %12 = arith.mulf %8, %11 : vector<8x8x16xf32>
    %cst_8 = arith.constant dense<0.000000e+00> : vector<8x8xf32>
    %13 = vector.multi_reduction <add>, %12, %cst_8 [2] : vector<8x8x16xf32> to vector<8x8xf32>
    %cst_9 = arith.constant dense<0xFF800000> : vector<8xf32>
    %14 = vector.multi_reduction <maximumf>, %13, %cst_9 [1] : vector<8x8xf32> to vector<8xf32>
    %15 = vector.shape_cast %14 : vector<8xf32> to vector<8x1xf32>
    %16 = vector.broadcast %15 : vector<8x1xf32> to vector<8x8xf32>
    %17 = arith.subf %13, %16 : vector<8x8xf32>
    %18 = math.exp %17 : vector<8x8xf32>
    %cst_10 = arith.constant dense<0.000000e+00> : vector<8xf32>
    %19 = vector.multi_reduction <add>, %18, %cst_10 [1] : vector<8x8xf32> to vector<8xf32>
    %20 = vector.shape_cast %19 : vector<8xf32> to vector<8x1xf32>
    %21 = vector.broadcast %20 : vector<8x1xf32> to vector<8x8xf32>
    %22 = arith.divf %18, %21 : vector<8x8xf32>
    %cst_11 = arith.constant 0.000000e+00 : f32
    %23 = vector.broadcast %cst_11 : f32 to vector<8x32xf32>
    %c0_12 = arith.constant 0 : index
    %c0_13 = arith.constant 0 : index
    %c0_14 = arith.constant 0 : index
    %24 = vector.load %arg1[%c0_12, %c0_13, %c0_14] : memref<8x8x32xf32, #tpu.memory_space<vmem>>, vector<8x8x32xf32>
    %25 = vector.shape_cast %22 : vector<8x8xf32> to vector<8x8x1xf32>
    %26 = vector.broadcast %25 : vector<8x8x1xf32> to vector<8x8x32xf32>
    %27 = arith.mulf %26, %24 : vector<8x8x32xf32>
    %cst_15 = arith.constant dense<0.000000e+00> : vector<8x32xf32>
    %28 = vector.multi_reduction <add>, %27, %cst_15 [1] : vector<8x8x32xf32> to vector<8x32xf32>
    %29 = arith.addf %23, %28 : vector<8x32xf32>
    %c0_16 = arith.constant 0 : index
    %c0_17 = arith.constant 0 : index
    %30 = vector.load %arg5[%c0_16, %c0_17] : memref<8x32xf32, #tpu.memory_space<vmem>>, vector<8x32xf32>
    tpu.vector_store %arg5[%c0_16, %c0_17], %29 {strides = array<i32>} : memref<8x32xf32, #tpu.memory_space<vmem>>, vector<8x32xf32>,
    return
  }
  func.func @transform_0(%arg0: i32) -> (i32, i32, i32) {
    %c0_i32 = arith.constant 0 : i32
    %c0_i32_0 = arith.constant 0 : i32
    %c0_i32_1 = arith.constant 0 : i32
    return %arg0, %c0_i32, %c0_i32_0 : i32, i32, i32
  }
  func.func @transform_1(%arg0: i32) -> (i32, i32) {
    %c0_i32 = arith.constant 0 : i32
    %c0_i32_0 = arith.constant 0 : i32
    %c0_i32_1 = arith.constant 0 : i32
    return %c0_i32, %c0_i32_0 : i32, i32
  }
  func.func @transform_2(%arg0: i32) -> (i32, i32) {
    %c0_i32 = arith.constant 0 : i32
    %c0_i32_0 = arith.constant 0 : i32
    %c0_i32_1 = arith.constant 0 : i32
    return %c0_i32, %c0_i32_0 : i32, i32
  }
  func.func @transform_3(%arg0: i32) -> (i32, i32) {
    %c0_i32 = arith.constant 0 : i32
    %c0_i32_0 = arith.constant 0 : i32
    %c0_i32_1 = arith.constant 0 : i32
    return %c0_i32, %c0_i32_0 : i32, i32
  }
  func.func @transform_4(%arg0: i32) -> (i32, i32) {
    %c0_i32 = arith.constant 0 : i32
    %c0_i32_0 = arith.constant 0 : i32
    return %arg0, %c0_i32 : i32, i32
  }
}

</mosaic_0001>

<llo_original>
// kernel: tpu_custom_call.1
$region0: #{tpu_custom_call.1}
  #allocation0 [shape = 'u32[]', space=smem, size = 0x4, offset = 0x4, fixed_abs, tag = 'smem constant byte address 0x4 - core index']
  #allocation1 [shape = 'u32[144,128]{1,0:T(1,128)}', space=vmem, size = 0x12000, scoped, tag = 'internal scratch']
  %s0 = inlined_call_operand.hbm [shape: f32[8,8,32], index: 0, kind: input, shape index: {}]
  %s1 = inlined_call_operand.hbm [shape: f32[32,16], index: 1, kind: input, shape index: {}]
  %s2 = inlined_call_operand.hbm [shape: f32[1,16], index: 2, kind: input, shape index: {}]
  %s3 = inlined_call_operand.hbm [shape: f32[1,16], index: 3, kind: input, shape index: {}]
  %s4 = inlined_call_operand.hbm [shape: f32[8,32], index: 4, kind: output, shape index: {}]
  %s5 = sld [smem:[#allocation0]]
  $region42: #{tpu_custom_call.1} parent=0
    _
  %s7 = ssub.s32 1, %s5
  %s8 = scalar_select 0, %s7, %s5
  $region1: #{tpu_custom_call.1} parent=0
    #allocation2 [shape = 'u8[32768]{0}', space=vmem, size = 0x8000, scoped, tag = 'input window, operand 0, single buffered']
    #allocation3 [shape = 's32[1]{0}', space=sflag, size = 0x4, scoped, tag = 'scoped memory for tpu_custom_call.1']
    #allocation4 [shape = 's32[1]{0}', space=sflag, size = 0x4, scoped, tag = 'scoped memory for tpu_custom_call.1']
    #allocation5 [shape = 'u8[16384]{0}', space=vmem, size = 0x4000, scoped, tag = 'input window, operand 1, single buffered']
    #allocation6 [shape = 's32[1]{0}', space=sflag, size = 0x4, scoped, tag = 'scoped memory for tpu_custom_call.1']
    #allocation7 [shape = 'u8[512]{0}', space=vmem, size = 0x400, scoped, tag = 'input window, operand 2, single buffered']
    #allocation8 [shape = 'u8[512]{0}', space=vmem, size = 0x400, scoped, tag = 'input window, operand 3, single buffered']
    #allocation9 [shape = 's32[1]{0}', space=sflag, size = 0x4, scoped, tag = 'scoped memory for tpu_custom_call.1']
    #allocation10 [shape = 'u8[4096]{0}', space=vmem, size = 0x1000, scoped, tag = 'output window, operand 0, single buffered']
    %9 = vsyncpa [#allocation3], 0
    %10 = vsyncpa [#allocation6], 0
    %11 = vsyncpa [#allocation9], 0
    %12 = vsyncpa [#allocation4], 0
    // Predicated region
    $region2: #{tpu_custom_call.1} parent=1 // pred_check
      _
    $region3: #{tpu_custom_call.1} parent=1 // pred_check_branch
      %14 = sbr.rel (0) target = $region5
    $region4: #{tpu_custom_call.1} parent=1 // pred_region
      %s16 = ssub.s32 1024, 1024
      %17 = vsyncadd [#allocation3], %s16
      %s18 = sshll.u32 [#allocation2], 4
      %s19 = int_to_ptr.vmem [resolvable:$true] %s18
      %24 = dma.hbm_to_vmem [thread:$0]  %s0, 1024, %s19, [#allocation3], 128, 128, 8
    $region5: #{tpu_custom_call.1} parent=1 // pred_fallthru
      _
    // Predicated region
    $region6: #{tpu_custom_call.1} parent=1 // pred_check
      _
    $region7: #{tpu_custom_call.1} parent=1 // pred_check_branch
      %26 = sbr.rel (0) target = $region9
    $region8: #{tpu_custom_call.1} parent=1 // pred_region
      %s28 = ssub.s32 512, 512
      %29 = vsyncadd [#allocation6], %s28
      %s30 = sshll.u32 [#allocation5], 4
      %s31 = int_to_ptr.vmem [resolvable:$true] %s30
      %36 = dma.hbm_to_vmem [thread:$0]  %s1, 512, %s31, [#allocation6], 128, 128, 8
    $region9: #{tpu_custom_call.1} parent=1 // pred_fallthru
      _
    // Predicated region
    $region10: #{tpu_custom_call.1} parent=1 // pred_check
      _
    $region11: #{tpu_custom_call.1} parent=1 // pred_check_branch
      %38 = sbr.rel (0) target = $region13
    $region12: #{tpu_custom_call.1} parent=1 // pred_region
      %s40 = ssub.s32 16, 16
      %41 = vsyncadd [#allocation6], %s40
      %s43 = sshll.u32 [#allocation7], 4
      %s44 = int_to_ptr.vmem [resolvable:$true] %s43
      %46 = dma.hbm_to_vmem [thread:$0]  %s2, 16, %s44, [#allocation6]
    $region13: #{tpu_custom_call.1} parent=1 // pred_fallthru
      _
    // Predicated region
    $region14: #{tpu_custom_call.1} parent=1 // pred_check
      _
    $region15: #{tpu_custom_call.1} parent=1 // pred_check_branch
      %48 = sbr.rel (0) target = $region17
    $region16: #{tpu_custom_call.1} parent=1 // pred_region
      %s50 = ssub.s32 16, 16
      %51 = vsyncadd [#allocation9], %s50
      %s53 = sshll.u32 [#allocation8], 4
      %s54 = int_to_ptr.vmem [resolvable:$true] %s53
      %56 = dma.hbm_to_vmem [thread:$0]  %s3, 16, %s54, [#allocation9]
    $region17: #{tpu_custom_call.1} parent=1 // pred_fallthru
      _
    // Predicated region
    $region18: #{tpu_custom_call.1} parent=1 // pred_check
      _
    $region19: #{tpu_custom_call.1} parent=1 // pred_check_branch
      %58 = sbr.rel (0) target = $region21
    $region20: #{tpu_custom_call.1} parent=1 // pred_region
      %59 = dma.done [#allocation3], 1024
    $region21: #{tpu_custom_call.1} parent=1 // pred_fallthru
      _
    // Predicated region
    $region22: #{tpu_custom_call.1} parent=1 // pred_check
      _
    $region23: #{tpu_custom_call.1} parent=1 // pred_check_branch
      %61 = sbr.rel (0) target = $region25
    $region24: #{tpu_custom_call.1} parent=1 // pred_region
      %62 = dma.done [#allocation6], 512
    $region25: #{tpu_custom_call.1} parent=1 // pred_fallthru
      _
    // Predicated region
    $region26: #{tpu_custom_call.1} parent=1 // pred_check
      _
    $region27: #{tpu_custom_call.1} parent=1 // pred_check_branch
      %64 = sbr.rel (0) target = $region29
    $region28: #{tpu_custom_call.1} parent=1 // pred_region
      %65 = dma.done [#allocation6], 16
    $region29: #{tpu_custom_call.1} parent=1 // pred_fallthru
      _
    // Predicated region
    $region30: #{tpu_custom_call.1} parent=1 // pred_check
      _
    $region31: #{tpu_custom_call.1} parent=1 // pred_check_branch
      %67 = sbr.rel (0) target = $region33
    $region32: #{tpu_custom_call.1} parent=1 // pred_region
      %68 = dma.done [#allocation9], 16
    $region33: #{tpu_custom_call.1} parent=1 // pred_fallthru
      _
    %v69 = vld [vmem:[#allocation2] sm:$0xff]
    %v70 = vld [vmem:[#allocation2 + $0x8] sm:$0xff]
    %v71 = vld [vmem:[#allocation2 + $0x10] sm:$0xff]
    %v72 = vld [vmem:[#allocation2 + $0x18] sm:$0xff]
    %v73 = vld [vmem:[#allocation2 + $0x20] sm:$0xff]
    %v74 = vld [vmem:[#allocation2 + $0x28] sm:$0xff]
    %v75 = vld [vmem:[#allocation2 + $0x30] sm:$0xff]
    %v76 = vld [vmem:[#allocation2 + $0x38] sm:$0xff]
    %v77 = vld [vmem:[#allocation5] sm:$0xff]
    %v78 = vld [vmem:[#allocation5 + $0x8] sm:$0xff]
    %v79 = vld [vmem:[#allocation5 + $0x10] sm:$0xff]
    %v80 = vld [vmem:[#allocation5 + $0x18] sm:$0xff]
    %v81 = vld [vmem:[#allocation7] sm:$0x1]
    %v83 = vlaneseq
    %v84 = vshrl.u32 %v83, 7
    %v85 = vsub.s32 0, %v84
    %v86 = vrot.slane %v81, %v85
    %vm88 = vcmask 261120
    %v90 = vsel %vm88, %v69, 0
    %v93 = vsel %vm88, %v70, 0
    %v96 = vsel %vm88, %v71, 0
    %v99 = vsel %vm88, %v72, 0
    %v102 = vsel %vm88, %v73, 0
    %v105 = vsel %vm88, %v74, 0
    %v108 = vsel %vm88, %v75, 0
    %v111 = vsel %vm88, %v76, 0
    %113 = vmatprep.subr.mxu0 0.0
    %114 = vmatpush1.msra.mxu0 %v77
    %115 = vmatprep.subr.mxu0 0.0
    %116 = vmatpush1.msra.mxu0 %v78
    %117 = vmatprep.subr.mxu0 0.0
    %118 = vmatpush1.msra.mxu0 %v79
    %119 = vmatprep.subr.mxu0 0.0
    %120 = vmatpush1.msra.mxu0 %v80
    %121 = vmatprep.subr.mxu0 0.0
    %122 = vmatpush1.msra.mxu0 0.0
    %123 = vmatprep.subr.mxu0 0.0
    %124 = vmatpush1.msra.mxu0 0.0
    %125 = vmatprep.subr.mxu0 0.0
    %126 = vmatpush1.msra.mxu0 0.0
    %127 = vmatprep.subr.mxu0 0.0
    %128 = vmatpush1.msra.mxu0 0.0
    %129 = vmatprep.subr.mxu0 0.0
    %130 = vmatpush1.msra.mxu0 0.0
    %131 = vmatprep.subr.mxu0 0.0
    %132 = vmatpush1.msra.mxu0 0.0
    %133 = vmatprep.subr.mxu0 0.0
    %134 = vmatpush1.msra.mxu0 0.0
    %135 = vmatprep.subr.mxu0 0.0
    %136 = vmatpush1.msra.mxu0 0.0
    %137 = vmatprep.subr.mxu0 0.0
    %138 = vmatpush1.msra.mxu0 0.0
    %139 = vmatprep.subr.mxu0 0.0
    %140 = vmatpush1.msra.mxu0 0.0
    %141 = vmatprep.subr.mxu0 0.0
    %142 = vmatpush1.msra.mxu0 0.0
    %143 = vmatprep.subr.mxu0 0.0
    %144 = vmatpush1.msra.mxu0 0.0
    %145 = vmatprep.subr.mxu0 0.0
    %146 = vmatpush1.msra.mxu0 0.0
    %147 = vmatprep.subr.mxu0 0.0
    %148 = vmatpush1.msra.mxu0 0.0
    %149 = vmatprep.subr.mxu0 0.0
    %150 = vmatpush1.msra.mxu0 0.0
    %151 = vmatprep.subr.mxu0 0.0
    %152 = vmatpush1.msra.mxu0 0.0
    %153 = vmatprep.subr.mxu0 0.0
    %154 = vmatpush1.msra.mxu0 0.0
    %155 = vmatprep.subr.mxu0 0.0
    %156 = vmatpush1.msra.mxu0 0.0
    %157 = vmatprep.subr.mxu0 0.0
    %158 = vmatpush1.msra.mxu0 0.0
    %159 = vmatprep.subr.mxu0 0.0
    %160 = vmatpush1.msra.mxu0 0.0
    %161 = vmatprep.subr.mxu0 0.0
    %162 = vmatpush1.msra.mxu0 0.0
    %163 = vmatprep.subr.mxu0 0.0
    %164 = vmatpush1.msra.mxu0 0.0
    %165 = vmatprep.subr.mxu0 0.0
    %166 = vmatpush1.msra.mxu0 0.0
    %167 = vmatprep.subr.mxu0 0.0
    %168 = vmatpush1.msra.mxu0 0.0
    %169 = vmatprep.subr.mxu0 0.0
    %170 = vmatpush1.msra.mxu0 0.0
    %171 = vmatprep.subr.mxu0 0.0
    %172 = vmatpush1.msra.mxu0 0.0
    %173 = vmatprep.subr.mxu0 0.0
    %174 = vmatpush1.msra.mxu0 0.0
    %175 = vmatprep.subr.mxu0 0.0
    %176 = vmatpush1.msra.mxu0 0.0
    %177 = vmatprep.mubr.f32.mxu0 0.0
    %178 = vmatmul.mubr.f32.gmra.mrb[0].mxu0 %v90
    %v179 = vpop.f32.mrb[0].mxu0
    %v180 = vadd.f32 %v86, %v179
    %v181 = vpop.f32.mrb[0].mxu0
    %182 = vmatprep.mubr.f32.mxu0 0.0
    %183 = vmatmul.mubr.f32.gmra.mrb[0].mxu0 %v93
    %v184 = vpop.f32.mrb[0].mxu0
    %v185 = vadd.f32 %v86, %v184
    %v186 = vpop.f32.mrb[0].mxu0
    %187 = vmatprep.mubr.f32.mxu0 0.0
    %188 = vmatmul.mubr.f32.gmra.mrb[0].mxu0 %v96
    %v189 = vpop.f32.mrb[0].mxu0
    %v190 = vadd.f32 %v86, %v189
    %v191 = vpop.f32.mrb[0].mxu0
    %192 = vmatprep.mubr.f32.mxu0 0.0
    %193 = vmatmul.mubr.f32.gmra.mrb[0].mxu0 %v99
    %v194 = vpop.f32.mrb[0].mxu0
    %v195 = vadd.f32 %v86, %v194
    %v196 = vpop.f32.mrb[0].mxu0
    %197 = vmatprep.mubr.f32.mxu0 0.0
    %198 = vmatmul.mubr.f32.gmra.mrb[0].mxu0 %v102
    %v199 = vpop.f32.mrb[0].mxu0
    %v200 = vadd.f32 %v86, %v199
    %v201 = vpop.f32.mrb[0].mxu0
    %202 = vmatprep.mubr.f32.mxu0 0.0
    %203 = vmatmul.mubr.f32.gmra.mrb[0].mxu0 %v105
    %v204 = vpop.f32.mrb[0].mxu0
    %v205 = vadd.f32 %v86, %v204
    %v206 = vpop.f32.mrb[0].mxu0
    %207 = vmatprep.mubr.f32.mxu0 0.0
    %208 = vmatmul.mubr.f32.gmra.mrb[0].mxu0 %v108
    %v209 = vpop.f32.mrb[0].mxu0
    %v210 = vadd.f32 %v86, %v209
    %v211 = vpop.f32.mrb[0].mxu0
    %212 = vmatprep.mubr.f32.mxu0 0.0
    %213 = vmatmul.mubr.f32.gmra.mrb[0].mxu0 %v111
    %v214 = vpop.f32.mrb[0].mxu0
    %v215 = vadd.f32 %v86, %v214
    %v216 = vpop.f32.mrb[0].mxu0
    %217 = vdwg.mxu0
    %v218 = vtanh.pop %v180
    %v219 = vtanh.pop %v185
    %v220 = vtanh.pop %v190
    %v221 = vtanh.pop %v195
    %v222 = vtanh.pop %v200
    %v223 = vtanh.pop %v205
    %v224 = vtanh.pop %v210
    %v225 = vtanh.pop %v215
    %v226 = vld [vmem:[#allocation8] sm:$0x1]
    %v228 = vlaneseq
    %v229 = vshrl.u32 %v228, 7
    %v230 = vsub.s32 0, %v229
    %v231 = vrot.slane %v226, %v230
    %v233 = vmul.f32 %v218, %v231
    %v234 = vmul.f32 %v219, %v231
    %v235 = vmul.f32 %v220, %v231
    %v236 = vmul.f32 %v221, %v231
    %v237 = vmul.f32 %v222, %v231
    %v238 = vmul.f32 %v223, %v231
    %v239 = vmul.f32 %v224, %v231
    %v240 = vmul.f32 %v225, %v231
    %vm241 = vcmask 130048
    %v242 = vsel %vm241, %v233, 0.0
    %243 = vadd.xlane.f32.xlu0 %v242
    %v244 = vpop.xlane.xlu0 %243
    %v245 = vsel %vm241, %v234, 0.0
    %246 = vadd.xlane.f32.xlu0 %v245
    %v247 = vpop.xlane.xlu0 %246
    %v248 = vsel %vm241, %v235, 0.0
    %249 = vadd.xlane.f32.xlu0 %v248
    %v250 = vpop.xlane.xlu0 %249
    %v251 = vsel %vm241, %v236, 0.0
    %252 = vadd.xlane.f32.xlu0 %v251
    %v253 = vpop.xlane.xlu0 %252
    %v254 = vsel %vm241, %v237, 0.0
    %255 = vadd.xlane.f32.xlu0 %v254
    %v256 = vpop.xlane.xlu0 %255
    %v257 = vsel %vm241, %v238, 0.0
    %258 = vadd.xlane.f32.xlu0 %v257
    %v259 = vpop.xlane.xlu0 %258
    %v260 = vsel %vm241, %v239, 0.0
    %261 = vadd.xlane.f32.xlu0 %v260
    %v262 = vpop.xlane.xlu0 %261
    %v263 = vsel %vm241, %v240, 0.0
    %264 = vadd.xlane.f32.xlu0 %v263
    %v265 = vpop.xlane.xlu0 %264
    %v274 = vlaneseq
    %v275 = vand.u32 %v274, 127
    %v276 = vlaneseq
    %v277 = vshrl.u32 %v276, 7
    %v278 = vsub.s32 %v275, %v277
    %v279 = vrot.slane %v244, %v278
    %v280 = vlaneseq
    %v281 = vshrl.u32 %v280, 7
    %v282 = vsub.s32 %v275, %v281
    %v283 = vrot.slane %v247, %v282
    %v284 = vlaneseq
    %v285 = vshrl.u32 %v284, 7
    %v286 = vsub.s32 %v275, %v285
    %v287 = vrot.slane %v250, %v286
    %v288 = vlaneseq
    %v289 = vshrl.u32 %v288, 7
    %v290 = vsub.s32 %v275, %v289
    %v291 = vrot.slane %v253, %v290
    %v292 = vlaneseq
    %v293 = vshrl.u32 %v292, 7
    %v294 = vsub.s32 %v275, %v293
    %v295 = vrot.slane %v256, %v294
    %v296 = vlaneseq
    %v297 = vshrl.u32 %v296, 7
    %v298 = vsub.s32 %v275, %v297
    %v299 = vrot.slane %v259, %v298
    %v300 = vlaneseq
    %v301 = vshrl.u32 %v300, 7
    %v302 = vsub.s32 %v275, %v301
    %v303 = vrot.slane %v262, %v302
    %v304 = vlaneseq
    %v305 = vshrl.u32 %v304, 7
    %v306 = vsub.s32 %v275, %v305
    %v307 = vrot.slane %v265, %v306
    %vm308 = vcmask 1041409
    %v309 = vsel %vm308, %v283, %v279
    %vm310 = vcmask 1042434
    %v311 = vsel %vm310, %v287, %v309
    %vm312 = vcmask 1043459
    %v313 = vsel %vm312, %v291, %v311
    %vm314 = vcmask 1044484
    %v315 = vsel %vm314, %v295, %v313
    %vm316 = vcmask 1045509
    %v317 = vsel %vm316, %v299, %v315
    %vm318 = vcmask 1046534
    %v319 = vsel %vm318, %v303, %v317
    %vm320 = vcmask 1047559
    %v321 = vsel %vm320, %v307, %v319
    %vm323 = vcmask 64512
    %v324 = vsel %vm323, %v321, -inf
    %325 = vmax.xlane.f32.xlu0 %v324
    %v326 = vpop.xlane.xlu0 %325
    %v328 = vlaneseq
    %v329 = vshrl.u32 %v328, 7
    %v330 = vsub.s32 0, %v329
    %v331 = vrot.slane %v326, %v330
    %v332 = vlaneseq
    %v333 = vshrl.u32 %v332, 7
    %v334 = vsub.s32 1, %v333
    %v335 = vrot.slane %v326, %v334
    %v336 = vlaneseq
    %v337 = vshrl.u32 %v336, 7
    %v338 = vsub.s32 2, %v337
    %v339 = vrot.slane %v326, %v338
    %v340 = vlaneseq
    %v341 = vshrl.u32 %v340, 7
    %v342 = vsub.s32 3, %v341
    %v343 = vrot.slane %v326, %v342
    %v344 = vlaneseq
    %v345 = vshrl.u32 %v344, 7
    %v346 = vsub.s32 4, %v345
    %v347 = vrot.slane %v326, %v346
    %v348 = vlaneseq
    %v349 = vshrl.u32 %v348, 7
    %v350 = vsub.s32 5, %v349
    %v351 = vrot.slane %v326, %v350
    %v352 = vlaneseq
    %v353 = vshrl.u32 %v352, 7
    %v354 = vsub.s32 6, %v353
    %v355 = vrot.slane %v326, %v354
    %v356 = vlaneseq
    %v357 = vshrl.u32 %v356, 7
    %v358 = vsub.s32 7, %v357
    %v359 = vrot.slane %v326, %v358
    %v368 = vsub.f32 %v244, %v331
    %v369 = vsub.f32 %v247, %v335
    %v370 = vsub.f32 %v250, %v339
    %v371 = vsub.f32 %v253, %v343
    %v372 = vsub.f32 %v256, %v347
    %v373 = vsub.f32 %v259, %v351
    %v374 = vsub.f32 %v262, %v355
    %v375 = vsub.f32 %v265, %v359
    %v376 = vmul.f32 %v368, 1.442695
    %v377 = vpow.pop %v376
    %v378 = vmul.f32 %v369, 1.442695
    %v379 = vpow.pop %v378
    %v380 = vmul.f32 %v370, 1.442695
    %v381 = vpow.pop %v380
    %v382 = vmul.f32 %v371, 1.442695
    %v383 = vpow.pop %v382
    %v384 = vmul.f32 %v372, 1.442695
    %v385 = vpow.pop %v384
    %v386 = vmul.f32 %v373, 1.442695
    %v387 = vpow.pop %v386
    %v388 = vmul.f32 %v374, 1.442695
    %v389 = vpow.pop %v388
    %v390 = vmul.f32 %v375, 1.442695
    %v391 = vpow.pop %v390
    %400 = vset.pattern.permute.xlu0 0
    %401 = vperm.xlu0 %400, %v377
    %v402 = vpop.permute.xlu0 %401
    %403 = vset.pattern.permute.xlu0 0
    %404 = vperm.xlu0 %403, %v379
    %v405 = vpop.permute.xlu0 %404
    %406 = vset.pattern.permute.xlu0 0
    %407 = vperm.xlu0 %406, %v381
    %v408 = vpop.permute.xlu0 %407
    %409 = vset.pattern.permute.xlu0 0
    %410 = vperm.xlu0 %409, %v383
    %v411 = vpop.permute.xlu0 %410
    %412 = vset.pattern.permute.xlu0 0
    %413 = vperm.xlu0 %412, %v385
    %v414 = vpop.permute.xlu0 %413
    %415 = vset.pattern.permute.xlu0 0
    %416 = vperm.xlu0 %415, %v387
    %v417 = vpop.permute.xlu0 %416
    %418 = vset.pattern.permute.xlu0 0
    %419 = vperm.xlu0 %418, %v389
    %v420 = vpop.permute.xlu0 %419
    %421 = vset.pattern.permute.xlu0 0
    %422 = vperm.xlu0 %421, %v391
    %v423 = vpop.permute.xlu0 %422
    %v424 = vlaneseq
    %v425 = vshrl.u32 %v424, 7
    %v426 = vsub.s32 %v275, %v425
    %v427 = vrot.slane %v402, %v426
    %v428 = vlaneseq
    %v429 = vshrl.u32 %v428, 7
    %v430 = vsub.s32 %v275, %v429
    %v431 = vrot.slane %v405, %v430
    %v432 = vlaneseq
    %v433 = vshrl.u32 %v432, 7
    %v434 = vsub.s32 %v275, %v433
    %v435 = vrot.slane %v408, %v434
    %v436 = vlaneseq
    %v437 = vshrl.u32 %v436, 7
    %v438 = vsub.s32 %v275, %v437
    %v439 = vrot.slane %v411, %v438
    %v440 = vlaneseq
    %v441 = vshrl.u32 %v440, 7
    %v442 = vsub.s32 %v275, %v441
    %v443 = vrot.slane %v414, %v442
    %v444 = vlaneseq
    %v445 = vshrl.u32 %v444, 7
    %v446 = vsub.s32 %v275, %v445
    %v447 = vrot.slane %v417, %v446
    %v448 = vlaneseq
    %v449 = vshrl.u32 %v448, 7
    %v450 = vsub.s32 %v275, %v449
    %v451 = vrot.slane %v420, %v450
    %v452 = vlaneseq
    %v453 = vshrl.u32 %v452, 7
    %v454 = vsub.s32 %v275, %v453
    %v455 = vrot.slane %v423, %v454
    %v456 = vsel %vm308, %v431, %v427
    %v457 = vsel %vm310, %v435, %v456
    %v458 = vsel %vm312, %v439, %v457
    %v459 = vsel %vm314, %v443, %v458
    %v460 = vsel %vm316, %v447, %v459
    %v461 = vsel %vm318, %v451, %v460
    %v462 = vsel %vm320, %v455, %v461
    %v464 = vsel %vm323, %v462, 0.0
    %465 = vadd.xlane.f32.xlu0 %v464
    %v466 = vpop.xlane.xlu0 %465
    %v468 = vlaneseq
    %v469 = vshrl.u32 %v468, 7
    %v470 = vsub.s32 0, %v469
    %v471 = vrot.slane %v466, %v470
    %v472 = vlaneseq
    %v473 = vshrl.u32 %v472, 7
    %v474 = vsub.s32 1, %v473
    %v475 = vrot.slane %v466, %v474
    %v476 = vlaneseq
    %v477 = vshrl.u32 %v476, 7
    %v478 = vsub.s32 2, %v477
    %v479 = vrot.slane %v466, %v478
    %v480 = vlaneseq
    %v481 = vshrl.u32 %v480, 7
    %v482 = vsub.s32 3, %v481
    %v483 = vrot.slane %v466, %v482
    %v484 = vlaneseq
    %v485 = vshrl.u32 %v484, 7
    %v486 = vsub.s32 4, %v485
    %v487 = vrot.slane %v466, %v486
    %v488 = vlaneseq
    %v489 = vshrl.u32 %v488, 7
    %v490 = vsub.s32 5, %v489
    %v491 = vrot.slane %v466, %v490
    %v492 = vlaneseq
    %v493 = vshrl.u32 %v492, 7
    %v494 = vsub.s32 6, %v493
    %v495 = vrot.slane %v466, %v494
    %v496 = vlaneseq
    %v497 = vshrl.u32 %v496, 7
    %v498 = vsub.s32 7, %v497
    %v499 = vrot.slane %v466, %v498
    %v508 = vrcp.pop %v471
    %v509 = vmul.f32 %v377, %v508
    %v510 = vrcp.pop %v475
    %v511 = vmul.f32 %v379, %v510
    %v512 = vrcp.pop %v479
    %v513 = vmul.f32 %v381, %v512
    %v514 = vrcp.pop %v483
    %v515 = vmul.f32 %v383, %v514
    %v516 = vrcp.pop %v487
    %v517 = vmul.f32 %v385, %v516
    %v518 = vrcp.pop %v491
    %v519 = vmul.f32 %v387, %v518
    %v520 = vrcp.pop %v495
    %v521 = vmul.f32 %v389, %v520
    %v522 = vrcp.pop %v499
    %v523 = vmul.f32 %v391, %v522
    %525 = vset.pattern.permute.xlu0 0
    %526 = vperm.xlu0 %525, %v509
    %v527 = vpop.permute.xlu0 %526
    %530 = vset.pattern.permute.xlu0 0
    %531 = vperm.xlu0 %530, %v511
    %v532 = vpop.permute.xlu0 %531
    %535 = vset.pattern.permute.xlu0 0
    %536 = vperm.xlu0 %535, %v513
    %v537 = vpop.permute.xlu0 %536
    %540 = vset.pattern.permute.xlu0 0
    %541 = vperm.xlu0 %540, %v515
    %v542 = vpop.permute.xlu0 %541
    %545 = vset.pattern.permute.xlu0 0
    %546 = vperm.xlu0 %545, %v517
    %v547 = vpop.permute.xlu0 %546
    %550 = vset.pattern.permute.xlu0 0
    %551 = vperm.xlu0 %550, %v519
    %v552 = vpop.permute.xlu0 %551
    %555 = vset.pattern.permute.xlu0 0
    %556 = vperm.xlu0 %555, %v521
    %v557 = vpop.permute.xlu0 %556
    %560 = vset.pattern.permute.xlu0 0
    %561 = vperm.xlu0 %560, %v523
    %v562 = vpop.permute.xlu0 %561
    %v564 = vmul.f32 %v527, %v69
    %v565 = vmul.f32 %v532, %v70
    %v566 = vmul.f32 %v537, %v71
    %v567 = vmul.f32 %v542, %v72
    %v568 = vmul.f32 %v547, %v73
    %v569 = vmul.f32 %v552, %v74
    %v570 = vmul.f32 %v557, %v75
    %v571 = vmul.f32 %v562, %v76
    %v572 = vsel %vm88, %v564, 0.0
    %v573 = vrot.slane %v572, 4
    %v574 = vadd.f32 %v572, %v573
    %v575 = vrot.slane %v574, 2
    %v576 = vadd.f32 %v574, %v575
    %v577 = vrot.slane %v576, 1
    %v578 = vadd.f32 %v576, %v577
    %v579 = vsel %vm88, %v565, 0.0
    %v580 = vrot.slane %v579, 4
    %v581 = vadd.f32 %v579, %v580
    %v582 = vrot.slane %v581, 2
    %v583 = vadd.f32 %v581, %v582
    %v584 = vrot.slane %v583, 1
    %v585 = vadd.f32 %v583, %v584
    %v586 = vsel %vm88, %v566, 0.0
    %v587 = vrot.slane %v586, 4
    %v588 = vadd.f32 %v586, %v587
    %v589 = vrot.slane %v588, 2
    %v590 = vadd.f32 %v588, %v589
    %v591 = vrot.slane %v590, 1
    %v592 = vadd.f32 %v590, %v591
    %v593 = vsel %vm88, %v567, 0.0
    %v594 = vrot.slane %v593, 4
    %v595 = vadd.f32 %v593, %v594
    %v596 = vrot.slane %v595, 2
    %v597 = vadd.f32 %v595, %v596
    %v598 = vrot.slane %v597, 1
    %v599 = vadd.f32 %v597, %v598
    %v600 = vsel %vm88, %v568, 0.0
    %v601 = vrot.slane %v600, 4
    %v602 = vadd.f32 %v600, %v601
    %v603 = vrot.slane %v602, 2
    %v604 = vadd.f32 %v602, %v603
    %v605 = vrot.slane %v604, 1
    %v606 = vadd.f32 %v604, %v605
    %v607 = vsel %vm88, %v569, 0.0
    %v608 = vrot.slane %v607, 4
    %v609 = vadd.f32 %v607, %v608
    %v610 = vrot.slane %v609, 2
    %v611 = vadd.f32 %v609, %v610
    %v612 = vrot.slane %v611, 1
    %v613 = vadd.f32 %v611, %v612
    %v614 = vsel %vm88, %v570, 0.0
    %v615 = vrot.slane %v614, 4
    %v616 = vadd.f32 %v614, %v615
    %v617 = vrot.slane %v616, 2
    %v618 = vadd.f32 %v616, %v617
    %v619 = vrot.slane %v618, 1
    %v620 = vadd.f32 %v618, %v619
    %v621 = vsel %vm88, %v571, 0.0
    %v622 = vrot.slane %v621, 4
    %v623 = vadd.f32 %v621, %v622
    %v624 = vrot.slane %v623, 2
    %v625 = vadd.f32 %v623, %v624
    %v626 = vrot.slane %v625, 1
    %v627 = vadd.f32 %v625, %v626
    %v628 = vadd.f32 %v578, 0.0
    %v629 = vadd.f32 %v585, 0.0
    %v630 = vadd.f32 %v592, 0.0
    %v631 = vadd.f32 %v599, 0.0
    %v632 = vadd.f32 %v606, 0.0
    %v633 = vadd.f32 %v613, 0.0
    %v634 = vadd.f32 %v620, 0.0
    %v635 = vadd.f32 %v627, 0.0
    %v644 = vsel %vm308, %v629, %v628
    %v645 = vsel %vm310, %v630, %v644
    %v646 = vsel %vm312, %v631, %v645
    %v647 = vsel %vm314, %v632, %v646
    %v648 = vsel %vm316, %v633, %v647
    %v649 = vsel %vm318, %v634, %v648
    %v650 = vsel %vm320, %v635, %v649
    %652 = vst.msk [vmem:[#allocation10] sm:$0xff] %vm88, %v650
    // Predicated region
    $region34: #{tpu_custom_call.1} parent=1 // pred_check
      _
    $region35: #{tpu_custom_call.1} parent=1 // pred_check_branch
      %654 = sbr.rel (0) target = $region37
    $region36: #{tpu_custom_call.1} parent=1 // pred_region
      %s656 = ssub.s32 128, 128
      %657 = vsyncadd [#allocation4], %s656
      %s659 = sshll.u32 [#allocation10], 4
      %s660 = int_to_ptr.vmem [resolvable:$true] %s659
      %662 = dma.vmem_to_hbm [thread:$0]  %s660, 128, %s4, [#allocation4]
    $region37: #{tpu_custom_call.1} parent=1 // pred_fallthru
      _
    // Predicated region
    $region38: #{tpu_custom_call.1} parent=1 // pred_check
      _
    $region39: #{tpu_custom_call.1} parent=1 // pred_check_branch
      %664 = sbr.rel (0) target = $region41
    $region40: #{tpu_custom_call.1} parent=1 // pred_region
      %665 = dma.done [#allocation4], 128
    $region41: #{tpu_custom_call.1} parent=1 // pred_fallthru
      _
    %666 = vsyncpa [#allocation3], 1
    %667 = vsyncpa [#allocation6], 1
    %668 = vsyncpa [#allocation9], 1
    %669 = vsyncpa [#allocation4], 1

// kernel: tpu_custom_call.1
$region0: #{tpu_custom_call.1}
  #allocation0 [shape = 'u32[]', space=smem, size = 0x4, offset = 0x4, fixed_abs, tag = 'smem constant byte address 0x4 - core index']
  #allocation1 [shape = 'u32[144,128]{1,0:T(1,128)}', space=vmem, size = 0x12000, scoped, tag = 'internal scratch']
  %s0 = inlined_call_operand.hbm [shape: f32[8,8,32], index: 0, kind: input, shape index: {}]
  %s1 = inlined_call_operand.hbm [shape: f32[32,16], index: 1, kind: input, shape index: {}]
  %s2 = inlined_call_operand.hbm [shape: f32[1,16], index: 2, kind: input, shape index: {}]
  %s3 = inlined_call_operand.hbm [shape: f32[1,16], index: 3, kind: input, shape index: {}]
  %s4 = inlined_call_operand.hbm [shape: f32[8,32], index: 4, kind: output, shape index: {}]
  %s5 = sld [smem:[#allocation0]]
  $region42: #{tpu_custom_call.1} parent=0
    _
  %s7 = ssub.s32 1, %s5
  %s8 = scalar_select 0, %s7, %s5
  $region1: #{tpu_custom_call.1} parent=0
    #allocation2 [shape = 'u8[32768]{0}', space=vmem, size = 0x8000, scoped, tag = 'input window, operand 0, single buffered']
    #allocation3 [shape = 's32[1]{0}', space=sflag, size = 0x4, scoped, tag = 'scoped memory for tpu_custom_call.1']
    #allocation4 [shape = 's32[1]{0}', space=sflag, size = 0x4, scoped, tag = 'scoped memory for tpu_custom_call.1']
    #allocation5 [shape = 'u8[16384]{0}', space=vmem, size = 0x4000, scoped, tag = 'input window, operand 1, single buffered']
    #allocation6 [shape = 's32[1]{0}', space=sflag, size = 0x4, scoped, tag = 'scoped memory for tpu_custom_call.1']
    #allocation7 [shape = 'u8[512]{0}', space=vmem, size = 0x400, scoped, tag = 'input window, operand 2, single buffered']
    #allocation8 [shape = 'u8[512]{0}', space=vmem, size = 0x400, scoped, tag = 'input window, operand 3, single buffered']
    #allocation9 [shape = 's32[1]{0}', space=sflag, size = 0x4, scoped, tag = 'scoped memory for tpu_custom_call.1']
    #allocation10 [shape = 'u8[4096]{0}', space=vmem, size = 0x1000, scoped, tag = 'output window, operand 0, single buffered']
    %9 = vsyncpa [#allocation3], 0
    %10 = vsyncpa [#allocation6], 0
    %11 = vsyncpa [#allocation9], 0
    %12 = vsyncpa [#allocation4], 0
    // Predicated region
    $region2: #{tpu_custom_call.1} parent=1 // pred_check
      _
    $region3: #{tpu_custom_call.1} parent=1 // pred_check_branch
      %14 = sbr.rel (0) target = $region5
    $region4: #{tpu_custom_call.1} parent=1 // pred_region
      %s16 = ssub.s32 1024, 1024
      %17 = vsyncadd [#allocation3], %s16
      %s18 = sshll.u32 [#allocation2], 4
      %s19 = int_to_ptr.vmem [resolvable:$true] %s18
      %24 = dma.hbm_to_vmem [thread:$0]  %s0, 1024, %s19, [#allocation3], 128, 128, 8
    $region5: #{tpu_custom_call.1} parent=1 // pred_fallthru
      _
    // Predicated region
    $region6: #{tpu_custom_call.1} parent=1 // pred_check
      _
    $region7: #{tpu_custom_call.1} parent=1 // pred_check_branch
      %26 = sbr.rel (0) target = $region9
    $region8: #{tpu_custom_call.1} parent=1 // pred_region
      %s28 = ssub.s32 512, 512
      %29 = vsyncadd [#allocation6], %s28
      %s30 = sshll.u32 [#allocation5], 4
      %s31 = int_to_ptr.vmem [resolvable:$true] %s30
      %36 = dma.hbm_to_vmem [thread:$0]  %s1, 512, %s31, [#allocation6], 128, 128, 8
    $region9: #{tpu_custom_call.1} parent=1 // pred_fallthru
      _
    // Predicated region
    $region10: #{tpu_custom_call.1} parent=1 // pred_check
      _
    $region11: #{tpu_custom_call.1} parent=1 // pred_check_branch
      %38 = sbr.rel (0) target = $region13
    $region12: #{tpu_custom_call.1} parent=1 // pred_region
      %s40 = ssub.s32 16, 16
      %41 = vsyncadd [#allocation6], %s40
      %s43 = sshll.u32 [#allocation7], 4
      %s44 = int_to_ptr.vmem [resolvable:$true] %s43
      %46 = dma.hbm_to_vmem [thread:$0]  %s2, 16, %s44, [#allocation6]
    $region13: #{tpu_custom_call.1} parent=1 // pred_fallthru
      _
    // Predicated region
    $region14: #{tpu_custom_call.1} parent=1 // pred_check
      _
    $region15: #{tpu_custom_call.1} parent=1 // pred_check_branch
      %48 = sbr.rel (0) target = $region17
    $region16: #{tpu_custom_call.1} parent=1 // pred_region
      %s50 = ssub.s32 16, 16
      %51 = vsyncadd [#allocation9], %s50
      %s53 = sshll.u32 [#allocation8], 4
      %s54 = int_to_ptr.vmem [resolvable:$true] %s53
      %56 = dma.hbm_to_vmem [thread:$0]  %s3, 16, %s54, [#allocation9]
    $region17: #{tpu_custom_call.1} parent=1 // pred_fallthru
      _
    // Predicated region
    $region18: #{tpu_custom_call.1} parent=1 // pred_check
      _
    $region19: #{tpu_custom_call.1} parent=1 // pred_check_branch
      %58 = sbr.rel (0) target = $region21
    $region20: #{tpu_custom_call.1} parent=1 // pred_region
      %59 = dma.done [#allocation3], 1024
    $region21: #{tpu_custom_call.1} parent=1 // pred_fallthru
      _
    // Predicated region
    $region22: #{tpu_custom_call.1} parent=1 // pred_check
      _
    $region23: #{tpu_custom_call.1} parent=1 // pred_check_branch
      %61 = sbr.rel (0) target = $region25
    $region24: #{tpu_custom_call.1} parent=1 // pred_region
      %62 = dma.done [#allocation6], 512
    $region25: #{tpu_custom_call.1} parent=1 // pred_fallthru
      _
    // Predicated region
    $region26: #{tpu_custom_call.1} parent=1 // pred_check
      _
    $region27: #{tpu_custom_call.1} parent=1 // pred_check_branch
      %64 = sbr.rel (0) target = $region29
    $region28: #{tpu_custom_call.1} parent=1 // pred_region
      %65 = dma.done [#allocation6], 16
    $region29: #{tpu_custom_call.1} parent=1 // pred_fallthru
      _
    // Predicated region
    $region30: #{tpu_custom_call.1} parent=1 // pred_check
      _
    $region31: #{tpu_custom_call.1} parent=1 // pred_check_branch
      %67 = sbr.rel (0) target = $region33
    $region32: #{tpu_custom_call.1} parent=1 // pred_region
      %68 = dma.done [#allocation9], 16
    $region33: #{tpu_custom_call.1} parent=1 // pred_fallthru
      _
    %v69 = vld [vmem:[#allocation2] sm:$0xff]
    %v70 = vld [vmem:[#allocation2 + $0x8] sm:$0xff]
    %v71 = vld [vmem:[#allocation2 + $0x10] sm:$0xff]
    %v72 = vld [vmem:[#allocation2 + $0x18] sm:$0xff]
    %v73 = vld [vmem:[#allocation2 + $0x20] sm:$0xff]
    %v74 = vld [vmem:[#allocation2 + $0x28] sm:$0xff]
    %v75 = vld [vmem:[#allocation2 + $0x30] sm:$0xff]
    %v76 = vld [vmem:[#allocation2 + $0x38] sm:$0xff]
    %v77 = vld [vmem:[#allocation5] sm:$0xff]
    %v78 = vld [vmem:[#allocation5 + $0x8] sm:$0xff]
    %v79 = vld [vmem:[#allocation5 + $0x10] sm:$0xff]
    %v80 = vld [vmem:[#allocation5 + $0x18] sm:$0xff]
    %v81 = vld [vmem:[#allocation7] sm:$0x1]
    %v83 = vlaneseq
    %v84 = vshrl.u32 %v83, 7
    %v85 = vsub.s32 0, %v84
    %v86 = vrot.slane %v81, %v85
    %vm88 = vcmask 261120
    %v90 = vsel %vm88, %v69, 0
    %v93 = vsel %vm88, %v70, 0
    %v96 = vsel %vm88, %v71, 0
    %v99 = vsel %vm88, %v72, 0
    %v102 = vsel %vm88, %v73, 0
    %v105 = vsel %vm88, %v74, 0
    %v108 = vsel %vm88, %v75, 0
    %v111 = vsel %vm88, %v76, 0
    %113 = vmatprep.subr.mxu0 0.0
    %114 = vmatpush1.msra.mxu0 %v77
    %115 = vmatprep.subr.mxu0 0.0
    %116 = vmatpush1.msra.mxu0 %v78
    %117 = vmatprep.subr.mxu0 0.0
    %118 = vmatpush1.msra.mxu0 %v79
    %119 = vmatprep.subr.mxu0 0.0
    %120 = vmatpush1.msra.mxu0 %v80
    %121 = vmatprep.subr.mxu0 0.0
    %122 = vmatpush1.msra.mxu0 0.0
    %123 = vmatprep.subr.mxu0 0.0
    %124 = vmatpush1.msra.mxu0 0.0
    %125 = vmatprep.subr.mxu0 0.0
    %126 = vmatpush1.msra.mxu0 0.0
    %127 = vmatprep.subr.mxu0 0.0
    %128 = vmatpush1.msra.mxu0 0.0
    %129 = vmatprep.subr.mxu0 0.0
    %130 = vmatpush1.msra.mxu0 0.0
    %131 = vmatprep.subr.mxu0 0.0
    %132 = vmatpush1.msra.mxu0 0.0
    %133 = vmatprep.subr.mxu0 0.0
    %134 = vmatpush1.msra.mxu0 0.0
    %135 = vmatprep.subr.mxu0 0.0
    %136 = vmatpush1.msra.mxu0 0.0
    %137 = vmatprep.subr.mxu0 0.0
    %138 = vmatpush1.msra.mxu0 0.0
    %139 = vmatprep.subr.mxu0 0.0
    %140 = vmatpush1.msra.mxu0 0.0
    %141 = vmatprep.subr.mxu0 0.0
    %142 = vmatpush1.msra.mxu0 0.0
    %143 = vmatprep.subr.mxu0 0.0
    %144 = vmatpush1.msra.mxu0 0.0
    %145 = vmatprep.subr.mxu0 0.0
    %146 = vmatpush1.msra.mxu0 0.0
    %147 = vmatprep.subr.mxu0 0.0
    %148 = vmatpush1.msra.mxu0 0.0
    %149 = vmatprep.subr.mxu0 0.0
    %150 = vmatpush1.msra.mxu0 0.0
    %151 = vmatprep.subr.mxu0 0.0
    %152 = vmatpush1.msra.mxu0 0.0
    %153 = vmatprep.subr.mxu0 0.0
    %154 = vmatpush1.msra.mxu0 0.0
    %155 = vmatprep.subr.mxu0 0.0
    %156 = vmatpush1.msra.mxu0 0.0
    %157 = vmatprep.subr.mxu0 0.0
    %158 = vmatpush1.msra.mxu0 0.0
    %159 = vmatprep.subr.mxu0 0.0
    %160 = vmatpush1.msra.mxu0 0.0
    %161 = vmatprep.subr.mxu0 0.0
    %162 = vmatpush1.msra.mxu0 0.0
    %163 = vmatprep.subr.mxu0 0.0
    %164 = vmatpush1.msra.mxu0 0.0
    %165 = vmatprep.subr.mxu0 0.0
    %166 = vmatpush1.msra.mxu0 0.0
    %167 = vmatprep.subr.mxu0 0.0
    %168 = vmatpush1.msra.mxu0 0.0
    %169 = vmatprep.subr.mxu0 0.0
    %170 = vmatpush1.msra.mxu0 0.0
    %171 = vmatprep.subr.mxu0 0.0
    %172 = vmatpush1.msra.mxu0 0.0
    %173 = vmatprep.subr.mxu0 0.0
    %174 = vmatpush1.msra.mxu0 0.0
    %175 = vmatprep.subr.mxu0 0.0
    %176 = vmatpush1.msra.mxu0 0.0
    %177 = vmatprep.mubr.f32.mxu0 0.0
    %178 = vmatmul.mubr.f32.gmra.mrb[0].mxu0 %v90
    %v179 = vpop.f32.mrb[0].mxu0
    %v180 = vadd.f32 %v86, %v179
    %v181 = vpop.f32.mrb[0].mxu0
    %182 = vmatprep.mubr.f32.mxu0 0.0
    %183 = vmatmul.mubr.f32.gmra.mrb[0].mxu0 %v93
    %v184 = vpop.f32.mrb[0].mxu0
    %v185 = vadd.f32 %v86, %v184
    %v186 = vpop.f32.mrb[0].mxu0
    %187 = vmatprep.mubr.f32.mxu0 0.0
    %188 = vmatmul.mubr.f32.gmra.mrb[0].mxu0 %v96
    %v189 = vpop.f32.mrb[0].mxu0
    %v190 = vadd.f32 %v86, %v189
    %v191 = vpop.f32.mrb[0].mxu0
    %192 = vmatprep.mubr.f32.mxu0 0.0
    %193 = vmatmul.mubr.f32.gmra.mrb[0].mxu0 %v99
    %v194 = vpop.f32.mrb[0].mxu0
    %v195 = vadd.f32 %v86, %v194
    %v196 = vpop.f32.mrb[0].mxu0
    %197 = vmatprep.mubr.f32.mxu0 0.0
    %198 = vmatmul.mubr.f32.gmra.mrb[0].mxu0 %v102
    %v199 = vpop.f32.mrb[0].mxu0
    %v200 = vadd.f32 %v86, %v199
    %v201 = vpop.f32.mrb[0].mxu0
    %202 = vmatprep.mubr.f32.mxu0 0.0
    %203 = vmatmul.mubr.f32.gmra.mrb[0].mxu0 %v105
    %v204 = vpop.f32.mrb[0].mxu0
    %v205 = vadd.f32 %v86, %v204
    %v206 = vpop.f32.mrb[0].mxu0
    %207 = vmatprep.mubr.f32.mxu0 0.0
    %208 = vmatmul.mubr.f32.gmra.mrb[0].mxu0 %v108
    %v209 = vpop.f32.mrb[0].mxu0
    %v210 = vadd.f32 %v86, %v209
    %v211 = vpop.f32.mrb[0].mxu0
    %212 = vmatprep.mubr.f32.mxu0 0.0
    %213 = vmatmul.mubr.f32.gmra.mrb[0].mxu0 %v111
    %v214 = vpop.f32.mrb[0].mxu0
    %v215 = vadd.f32 %v86, %v214
    %v216 = vpop.f32.mrb[0].mxu0
    %217 = vdwg.mxu0
    %v218 = vtanh.pop %v180
    %v219 = vtanh.pop %v185
    %v220 = vtanh.pop %v190
    %v221 = vtanh.pop %v195
    %v222 = vtanh.pop %v200
    %v223 = vtanh.pop %v205
    %v224 = vtanh.pop %v210
    %v225 = vtanh.pop %v215
    %v226 = vld [vmem:[#allocation8] sm:$0x1]
    %v228 = vlaneseq
    %v229 = vshrl.u32 %v228, 7
    %v230 = vsub.s32 0, %v229
    %v231 = vrot.slane %v226, %v230
    %v233 = vmul.f32 %v218, %v231
    %v234 = vmul.f32 %v219, %v231
    %v235 = vmul.f32 %v220, %v231
    %v236 = vmul.f32 %v221, %v231
    %v237 = vmul.f32 %v222, %v231
    %v238 = vmul.f32 %v223, %v231
    %v239 = vmul.f32 %v224, %v231
    %v240 = vmul.f32 %v225, %v231
    %vm241 = vcmask 130048
    %v242 = vsel %vm241, %v233, 0.0
    %243 = vadd.xlane.f32.xlu0 %v242
    %v244 = vpop.xlane.xlu0 %243
    %v245 = vsel %vm241, %v234, 0.0
    %246 = vadd.xlane.f32.xlu0 %v245
    %v247 = vpop.xlane.xlu0 %246
    %v248 = vsel %vm241, %v235, 0.0
    %249 = vadd.xlane.f32.xlu0 %v248
    %v250 = vpop.xlane.xlu0 %249
    %v251 = vsel %vm241, %v236, 0.0
    %252 = vadd.xlane.f32.xlu0 %v251
    %v253 = vpop.xlane.xlu0 %252
    %v254 = vsel %vm241, %v237, 0.0
    %255 = vadd.xlane.f32.xlu0 %v254
    %v256 = vpop.xlane.xlu0 %255
    %v257 = vsel %vm241, %v238, 0.0
    %258 = vadd.xlane.f32.xlu0 %v257
    %v259 = vpop.xlane.xlu0 %258
    %v260 = vsel %vm241, %v239, 0.0
    %261 = vadd.xlane.f32.xlu0 %v260
    %v262 = vpop.xlane.xlu0 %261
    %v263 = vsel %vm241, %v240, 0.0
    %264 = vadd.xlane.f32.xlu0 %v263
    %v265 = vpop.xlane.xlu0 %264
    %v274 = vlaneseq
    %v275 = vand.u32 %v274, 127
    %v276 = vlaneseq
    %v277 = vshrl.u32 %v276, 7
    %v278 = vsub.s32 %v275, %v277
    %v279 = vrot.slane %v244, %v278
    %v280 = vlaneseq
    %v281 = vshrl.u32 %v280, 7
    %v282 = vsub.s32 %v275, %v281
    %v283 = vrot.slane %v247, %v282
    %v284 = vlaneseq
    %v285 = vshrl.u32 %v284, 7
    %v286 = vsub.s32 %v275, %v285
    %v287 = vrot.slane %v250, %v286
    %v288 = vlaneseq
    %v289 = vshrl.u32 %v288, 7
    %v290 = vsub.s32 %v275, %v289
    %v291 = vrot.slane %v253, %v290
    %v292 = vlaneseq
    %v293 = vshrl.u32 %v292, 7
    %v294 = vsub.s32 %v275, %v293
    %v295 = vrot.slane %v256, %v294
    %v296 = vlaneseq
    %v297 = vshrl.u32 %v296, 7
    %v298 = vsub.s32 %v275, %v297
    %v299 = vrot.slane %v259, %v298
    %v300 = vlaneseq
    %v301 = vshrl.u32 %v300, 7
    %v302 = vsub.s32 %v275, %v301
    %v303 = vrot.slane %v262, %v302
    %v304 = vlaneseq
    %v305 = vshrl.u32 %v304, 7
    %v306 = vsub.s32 %v275, %v305
    %v307 = vrot.slane %v265, %v306
    %vm308 = vcmask 1041409
    %v309 = vsel %vm308, %v283, %v279
    %vm310 = vcmask 1042434
    %v311 = vsel %vm310, %v287, %v309
    %vm312 = vcmask 1043459
    %v313 = vsel %vm312, %v291, %v311
    %vm314 = vcmask 1044484
    %v315 = vsel %vm314, %v295, %v313
    %vm316 = vcmask 1045509
    %v317 = vsel %vm316, %v299, %v315
    %vm318 = vcmask 1046534
    %v319 = vsel %vm318, %v303, %v317
    %vm320 = vcmask 1047559
    %v321 = vsel %vm320, %v307, %v319
    %vm323 = vcmask 64512
    %v324 = vsel %vm323, %v321, -inf
    %325 = vmax.xlane.f32.xlu0 %v324
    %v326 = vpop.xlane.xlu0 %325
    %v328 = vlaneseq
    %v329 = vshrl.u32 %v328, 7
    %v330 = vsub.s32 0, %v329
    %v331 = vrot.slane %v326, %v330
    %v332 = vlaneseq
    %v333 = vshrl.u32 %v332, 7
    %v334 = vsub.s32 1, %v333
    %v335 = vrot.slane %v326, %v334
    %v336 = vlaneseq
    %v337 = vshrl.u32 %v336, 7
    %v338 = vsub.s32 2, %v337
    %v339 = vrot.slane %v326, %v338
    %v340 = vlaneseq
    %v341 = vshrl.u32 %v340, 7
    %v342 = vsub.s32 3, %v341
    %v343 = vrot.slane %v326, %v342
    %v344 = vlaneseq
    %v345 = vshrl.u32 %v344, 7
    %v346 = vsub.s32 4, %v345
    %v347 = vrot.slane %v326, %v346
    %v348 = vlaneseq
    %v349 = vshrl.u32 %v348, 7
    %v350 = vsub.s32 5, %v349
    %v351 = vrot.slane %v326, %v350
    %v352 = vlaneseq
    %v353 = vshrl.u32 %v352, 7
    %v354 = vsub.s32 6, %v353
    %v355 = vrot.slane %v326, %v354
    %v356 = vlaneseq
    %v357 = vshrl.u32 %v356, 7
    %v358 = vsub.s32 7, %v357
    %v359 = vrot.slane %v326, %v358
    %v368 = vsub.f32 %v244, %v331
    %v369 = vsub.f32 %v247, %v335
    %v370 = vsub.f32 %v250, %v339
    %v371 = vsub.f32 %v253, %v343
    %v372 = vsub.f32 %v256, %v347
    %v373 = vsub.f32 %v259, %v351
    %v374 = vsub.f32 %v262, %v355
    %v375 = vsub.f32 %v265, %v359
    %v376 = vmul.f32 %v368, 1.442695
    %v377 = vpow.pop %v376
    %v378 = vmul.f32 %v369, 1.442695
    %v379 = vpow.pop %v378
    %v380 = vmul.f32 %v370, 1.442695
    %v381 = vpow.pop %v380
    %v382 = vmul.f32 %v371, 1.442695
    %v383 = vpow.pop %v382
    %v384 = vmul.f32 %v372, 1.442695
    %v385 = vpow.pop %v384
    %v386 = vmul.f32 %v373, 1.442695
    %v387 = vpow.pop %v386
    %v388 = vmul.f32 %v374, 1.442695
    %v389 = vpow.pop %v388
    %v390 = vmul.f32 %v375, 1.442695
    %v391 = vpow.pop %v390
    %400 = vset.pattern.permute.xlu0 0
    %401 = vperm.xlu0 %400, %v377
    %v402 = vpop.permute.xlu0 %401
    %403 = vset.pattern.permute.xlu0 0
    %404 = vperm.xlu0 %403, %v379
    %v405 = vpop.permute.xlu0 %404
    %406 = vset.pattern.permute.xlu0 0
    %407 = vperm.xlu0 %406, %v381
    %v408 = vpop.permute.xlu0 %407
    %409 = vset.pattern.permute.xlu0 0
    %410 = vperm.xlu0 %409, %v383
    %v411 = vpop.permute.xlu0 %410
    %412 = vset.pattern.permute.xlu0 0
    %413 = vperm.xlu0 %412, %v385
    %v414 = vpop.permute.xlu0 %413
    %415 = vset.pattern.permute.xlu0 0
    %416 = vperm.xlu0 %415, %v387
    %v417 = vpop.permute.xlu0 %416
    %418 = vset.pattern.permute.xlu0 0
    %419 = vperm.xlu0 %418, %v389
    %v420 = vpop.permute.xlu0 %419
    %421 = vset.pattern.permute.xlu0 0
    %422 = vperm.xlu0 %421, %v391
    %v423 = vpop.permute.xlu0 %422
    %v424 = vlaneseq
    %v425 = vshrl.u32 %v424, 7
    %v426 = vsub.s32 %v275, %v425
    %v427 = vrot.slane %v402, %v426
    %v428 = vlaneseq
    %v429 = vshrl.u32 %v428, 7
    %v430 = vsub.s32 %v275, %v429
    %v431 = vrot.slane %v405, %v430
    %v432 = vlaneseq
    %v433 = vshrl.u32 %v432, 7
    %v434 = vsub.s32 %v275, %v433
    %v435 = vrot.slane %v408, %v434
    %v436 = vlaneseq
    %v437 = vshrl.u32 %v436, 7
    %v438 = vsub.s32 %v275, %v437
    %v439 = vrot.slane %v411, %v438
    %v440 = vlaneseq
    %v441 = vshrl.u32 %v440, 7
    %v442 = vsub.s32 %v275, %v441
    %v443 = vrot.slane %v414, %v442
    %v444 = vlaneseq
    %v445 = vshrl.u32 %v444, 7
    %v446 = vsub.s32 %v275, %v445
    %v447 = vrot.slane %v417, %v446
    %v448 = vlaneseq
    %v449 = vshrl.u32 %v448, 7
    %v450 = vsub.s32 %v275, %v449
    %v451 = vrot.slane %v420, %v450
    %v452 = vlaneseq
    %v453 = vshrl.u32 %v452, 7
    %v454 = vsub.s32 %v275, %v453
    %v455 = vrot.slane %v423, %v454
    %v456 = vsel %vm308, %v431, %v427
    %v457 = vsel %vm310, %v435, %v456
    %v458 = vsel %vm312, %v439, %v457
    %v459 = vsel %vm314, %v443, %v458
    %v460 = vsel %vm316, %v447, %v459
    %v461 = vsel %vm318, %v451, %v460
    %v462 = vsel %vm320, %v455, %v461
    %v464 = vsel %vm323, %v462, 0.0
    %465 = vadd.xlane.f32.xlu0 %v464
    %v466 = vpop.xlane.xlu0 %465
    %v468 = vlaneseq
    %v469 = vshrl.u32 %v468, 7
    %v470 = vsub.s32 0, %v469
    %v471 = vrot.slane %v466, %v470
    %v472 = vlaneseq
    %v473 = vshrl.u32 %v472, 7
    %v474 = vsub.s32 1, %v473
    %v475 = vrot.slane %v466, %v474
    %v476 = vlaneseq
    %v477 = vshrl.u32 %v476, 7
    %v478 = vsub.s32 2, %v477
    %v479 = vrot.slane %v466, %v478
    %v480 = vlaneseq
    %v481 = vshrl.u32 %v480, 7
    %v482 = vsub.s32 3, %v481
    %v483 = vrot.slane %v466, %v482
    %v484 = vlaneseq
    %v485 = vshrl.u32 %v484, 7
    %v486 = vsub.s32 4, %v485
    %v487 = vrot.slane %v466, %v486
    %v488 = vlaneseq
    %v489 = vshrl.u32 %v488, 7
    %v490 = vsub.s32 5, %v489
    %v491 = vrot.slane %v466, %v490
    %v492 = vlaneseq
    %v493 = vshrl.u32 %v492, 7
    %v494 = vsub.s32 6, %v493
    %v495 = vrot.slane %v466, %v494
    %v496 = vlaneseq
    %v497 = vshrl.u32 %v496, 7
    %v498 = vsub.s32 7, %v497
    %v499 = vrot.slane %v466, %v498
    %v508 = vrcp.pop %v471
    %v509 = vmul.f32 %v377, %v508
    %v510 = vrcp.pop %v475
    %v511 = vmul.f32 %v379, %v510
    %v512 = vrcp.pop %v479
    %v513 = vmul.f32 %v381, %v512
    %v514 = vrcp.pop %v483
    %v515 = vmul.f32 %v383, %v514
    %v516 = vrcp.pop %v487
    %v517 = vmul.f32 %v385, %v516
    %v518 = vrcp.pop %v491
    %v519 = vmul.f32 %v387, %v518
    %v520 = vrcp.pop %v495
    %v521 = vmul.f32 %v389, %v520
    %v522 = vrcp.pop %v499
    %v523 = vmul.f32 %v391, %v522
    %525 = vset.pattern.permute.xlu0 0
    %526 = vperm.xlu0 %525, %v509
    %v527 = vpop.permute.xlu0 %526
    %530 = vset.pattern.permute.xlu0 0
    %531 = vperm.xlu0 %530, %v511
    %v532 = vpop.permute.xlu0 %531
    %535 = vset.pattern.permute.xlu0 0
    %536 = vperm.xlu0 %535, %v513
    %v537 = vpop.permute.xlu0 %536
    %540 = vset.pattern.permute.xlu0 0
    %541 = vperm.xlu0 %540, %v515
    %v542 = vpop.permute.xlu0 %541
    %545 = vset.pattern.permute.xlu0 0
    %546 = vperm.xlu0 %545, %v517
    %v547 = vpop.permute.xlu0 %546
    %550 = vset.pattern.permute.xlu0 0
    %551 = vperm.xlu0 %550, %v519
    %v552 = vpop.permute.xlu0 %551
    %555 = vset.pattern.permute.xlu0 0
    %556 = vperm.xlu0 %555, %v521
    %v557 = vpop.permute.xlu0 %556
    %560 = vset.pattern.permute.xlu0 0
    %561 = vperm.xlu0 %560, %v523
    %v562 = vpop.permute.xlu0 %561
    %v564 = vmul.f32 %v527, %v69
    %v565 = vmul.f32 %v532, %v70
    %v566 = vmul.f32 %v537, %v71
    %v567 = vmul.f32 %v542, %v72
    %v568 = vmul.f32 %v547, %v73
    %v569 = vmul.f32 %v552, %v74
    %v570 = vmul.f32 %v557, %v75
    %v571 = vmul.f32 %v562, %v76
    %v572 = vsel %vm88, %v564, 0.0
    %v573 = vrot.slane %v572, 4
    %v574 = vadd.f32 %v572, %v573
    %v575 = vrot.slane %v574, 2
    %v576 = vadd.f32 %v574, %v575
    %v577 = vrot.slane %v576, 1
    %v578 = vadd.f32 %v576, %v577
    %v579 = vsel %vm88, %v565, 0.0
    %v580 = vrot.slane %v579, 4
    %v581 = vadd.f32 %v579, %v580
    %v582 = vrot.slane %v581, 2
    %v583 = vadd.f32 %v581, %v582
    %v584 = vrot.slane %v583, 1
    %v585 = vadd.f32 %v583, %v584
    %v586 = vsel %vm88, %v566, 0.0
    %v587 = vrot.slane %v586, 4
    %v588 = vadd.f32 %v586, %v587
    %v589 = vrot.slane %v588, 2
    %v590 = vadd.f32 %v588, %v589
    %v591 = vrot.slane %v590, 1
    %v592 = vadd.f32 %v590, %v591
    %v593 = vsel %vm88, %v567, 0.0
    %v594 = vrot.slane %v593, 4
    %v595 = vadd.f32 %v593, %v594
    %v596 = vrot.slane %v595, 2
    %v597 = vadd.f32 %v595, %v596
    %v598 = vrot.slane %v597, 1
    %v599 = vadd.f32 %v597, %v598
    %v600 = vsel %vm88, %v568, 0.0
    %v601 = vrot.slane %v600, 4
    %v602 = vadd.f32 %v600, %v601
    %v603 = vrot.slane %v602, 2
    %v604 = vadd.f32 %v602, %v603
    %v605 = vrot.slane %v604, 1
    %v606 = vadd.f32 %v604, %v605
    %v607 = vsel %vm88, %v569, 0.0
    %v608 = vrot.slane %v607, 4
    %v609 = vadd.f32 %v607, %v608
    %v610 = vrot.slane %v609, 2
    %v611 = vadd.f32 %v609, %v610
    %v612 = vrot.slane %v611, 1
    %v613 = vadd.f32 %v611, %v612
    %v614 = vsel %vm88, %v570, 0.0
    %v615 = vrot.slane %v614, 4
    %v616 = vadd.f32 %v614, %v615
    %v617 = vrot.slane %v616, 2
    %v618 = vadd.f32 %v616, %v617
    %v619 = vrot.slane %v618, 1
    %v620 = vadd.f32 %v618, %v619
    %v621 = vsel %vm88, %v571, 0.0
    %v622 = vrot.slane %v621, 4
    %v623 = vadd.f32 %v621, %v622
    %v624 = vrot.slane %v623, 2
    %v625 = vadd.f32 %v623, %v624
    %v626 = vrot.slane %v625, 1
    %v627 = vadd.f32 %v625, %v626
    %v628 = vadd.f32 %v578, 0.0
    %v629 = vadd.f32 %v585, 0.0
    %v630 = vadd.f32 %v592, 0.0
    %v631 = vadd.f32 %v599, 0.0
    %v632 = vadd.f32 %v606, 0.0
    %v633 = vadd.f32 %v613, 0.0
    %v634 = vadd.f32 %v620, 0.0
    %v635 = vadd.f32 %v627, 0.0
    %v644 = vsel %vm308, %v629, %v628
    %v645 = vsel %vm310, %v630, %v644
    %v646 = vsel %vm312, %v631, %v645
    %v647 = vsel %vm314, %v632, %v646
    %v648 = vsel %vm316, %v633, %v647
    %v649 = vsel %vm318, %v634, %v648
    %v650 = vsel %vm320, %v635, %v649
    %652 = vst.msk [vmem:[#allocation10] sm:$0xff] %vm88, %v650
    // Predicated region
    $region34: #{tpu_custom_call.1} parent=1 // pred_check
      _
    $region35: #{tpu_custom_call.1} parent=1 // pred_check_branch
      %654 = sbr.rel (0) target = $region37
    $region36: #{tpu_custom_call.1} parent=1 // pred_region
      %s656 = ssub.s32 128, 128
      %657 = vsyncadd [#allocation4], %s656
      %s659 = sshll.u32 [#allocation10], 4
      %s660 = int_to_ptr.vmem [resolvable:$true] %s659
      %662 = dma.vmem_to_hbm [thread:$0]  %s660, 128, %s4, [#allocation4]
    $region37: #{tpu_custom_call.1} parent=1 // pred_fallthru
      _
    // Predicated region
    $region38: #{tpu_custom_call.1} parent=1 // pred_check
      _
    $region39: #{tpu_custom_call.1} parent=1 // pred_check_branch
      %664 = sbr.rel (0) target = $region41
    $region40: #{tpu_custom_call.1} parent=1 // pred_region
      %665 = dma.done [#allocation4], 128
    $region41: #{tpu_custom_call.1} parent=1 // pred_fallthru
      _
    %666 = vsyncpa [#allocation3], 1
    %667 = vsyncpa [#allocation6], 1
    %668 = vsyncpa [#allocation9], 1
    %669 = vsyncpa [#allocation4], 1

</llo_original>
